<compile_context>
chip_gen: v5e
topology: v5e:2x2
jax: 0.10.0
libtpu: 0.0.40
codegen_flags: <defaults>
</compile_context>

<pallas_src>
import math

import jax
import jax.numpy as jnp
from jax.experimental import pallas as pl
from jax.experimental.pallas import tpu as pltpu


LANES = 128
SUBLANES = 8
MAX_BLOCK_ROWS = 1024  # 1024x128 f32 tiles hit the HBM roofline plateau on v5e/v6e/v7x


def _complex_to_real_kernel(params_ref, x_ref, o_ref):
    # params_ref (SMEM, f32[9]): [w00, w01, w10, w11, b0, b1, v0, v1, c]
    w00 = params_ref[0]
    w01 = params_ref[1]
    w10 = params_ref[2]
    w11 = params_ref[3]
    b0 = params_ref[4]
    b1 = params_ref[5]
    v0 = params_ref[6]
    v1 = params_ref[7]
    c = params_ref[8]

    # x_ref block: (2, BLOCK_ROWS, 128) -- plane 0 = re, plane 1 = im
    xre = x_ref[0]
    xim = x_ref[1]

    # fc1 (2 -> 2), expressed element-wise over the flattened batch (VPU FMAs)
    h0 = xre * w00 + xim * w01 + b0
    h1 = xre * w10 + xim * w11 + b1

    # SiLU (EUP handles the sigmoid's exp; VPU does the multiplies)
    h0 = h0 * jax.nn.sigmoid(h0)
    h1 = h1 * jax.nn.sigmoid(h1)

    # fc2 (2 -> 1) + squeeze(-1)
    o_ref[...] = h0 * v0 + h1 * v1 + c


def complex_to_real(x, w1, b1, w2, b2):
    """x: (..., 2) float32.  Returns shape x.shape[:-1], matching the PyTorch module."""
    assert x.shape[-1] == 2
    out_shape = x.shape[:-1]
    n = int(math.prod(out_shape)) if out_shape else 1

    # --- glue: flatten, split re/im into two lane-dense planes with ONE transpose+pad ---
    rows = pl.cdiv(n, LANES)
    rows8 = pl.cdiv(rows, SUBLANES) * SUBLANES
    block_rows = min(MAX_BLOCK_ROWS, rows8)           # big block if data is big, else exact fit
    rows_padded = pl.cdiv(rows8, block_rows) * block_rows
    n_padded = rows_padded * LANES

    x_t = x.reshape(n, 2).astype(jnp.float32).T       # (2, n): one pass, no scatter
    x_t = jnp.pad(x_t, ((0, 0), (0, n_padded - n)))
    x_stacked = x_t.reshape(2, rows_padded, LANES)    # plane 0 = re, plane 1 = im

    # Pack all 9 scalars into one SMEM vector: [W1.ravel(), b1, W2.ravel(), b2]
    params = jnp.concatenate(
        [w1.reshape(-1), b1.reshape(-1), w2.reshape(-1), b2.reshape(-1)]
    ).astype(jnp.float32)  # shape (9,)

    grid = (rows_padded // block_rows,)
    out = pl.pallas_call(
        _complex_to_real_kernel,
        out_shape=jax.ShapeDtypeStruct((rows_padded, LANES), jnp.float32),
        grid=grid,
        in_specs=[
            pl.BlockSpec(memory_space=pltpu.MemorySpace.SMEM),                 # params (whole)
            pl.BlockSpec((2, block_rows, LANES), lambda i: (0, i, 0)),         # stacked re/im
        ],
        out_specs=pl.BlockSpec((block_rows, LANES), lambda i: (i, 0)),
        compiler_params=pltpu.CompilerParams(
            dimension_semantics=("parallel",),
            vmem_limit_bytes=64 << 20,
        ),
    )(params, x_stacked)

    return out.reshape(-1)[:n].reshape(out_shape)


def _reference(x, w1, b1, w2, b2):
    h = x @ w1.T + b1
    h = h * jax.nn.sigmoid(h)
    y = h @ w2.T + b2
    return jnp.squeeze(y, axis=-1)


if __name__ == "__main__":
    key = jax.random.PRNGKey(0)
    kx, k1, k2, k3, k4, kx2 = jax.random.split(key, 6)

    # Deterministic parameter init (PyTorch Linear default: U(-1/sqrt(fan_in), 1/sqrt(fan_in)))
    bound1 = 1.0 / math.sqrt(2.0)
    w1 = jax.random.uniform(k1, (2, 2), jnp.float32, -bound1, bound1)
    b1 = jax.random.uniform(k2, (2,), jnp.float32, -bound1, bound1)
    bound2 = 1.0 / math.sqrt(2.0)
    w2 = jax.random.uniform(k3, (1, 2), jnp.float32, -bound2, bound2)
    b2 = jax.random.uniform(k4, (1,), jnp.float32, -bound2, bound2)

    # Small input consistent with the module: (..., 2) "complex" pairs.
    x = jax.random.normal(kx, (4, 16, 16, 2), jnp.float32)

    y = complex_to_real(x, w1, b1, w2, b2)
    y = jax.block_until_ready(y)

    y_ref = _reference(x, w1, b1, w2, b2)
    assert y.shape == x.shape[:-1], (y.shape, x.shape[:-1])
    assert jnp.allclose(y, y_ref, atol=1e-5, rtol=1e-5), float(jnp.max(jnp.abs(y - y_ref)))

    # Second (ragged) case to exercise padding of a non-multiple batch.
    x2 = jax.random.normal(kx2, (3, 7, 5, 2), jnp.float32)
    y2 = jax.block_until_ready(complex_to_real(x2, w1, b1, w2, b2))
    y2_ref = _reference(x2, w1, b1, w2, b2)
    assert y2.shape == x2.shape[:-1], (y2.shape, x2.shape[:-1])
    assert jnp.allclose(y2, y2_ref, atol=1e-5, rtol=1e-5), float(jnp.max(jnp.abs(y2 - y2_ref)))

    print("KERNEL_OK")
</pallas_src>

<mosaic_0001>
module attributes {stable_mosaic.version = 11 : i64} {
  func.func @_complex_to_real_kernel(%arg0: i32, %arg1: memref<9xf32, #tpu.memory_space<smem>>, %arg2: memref<2x8x128xf32, #tpu.memory_space<vmem>>, %arg3: memref<8x128xf32, #tpu.memory_space<vmem>>) attributes {dimension_semantics = [#tpu.dimension_semantics<parallel>], iteration_bounds = array<i64: 1>, scalar_prefetch = 0 : i64, scratch_operands = 0 : i64, tpu.core_type = #tpu.core_type<tc>, window_params = [{transform_indices = @transform_0, window_bounds = array<i64: 9>}, {transform_indices = @transform_1, window_bounds = array<i64: 2, 8, 128>}, {transform_indices = @transform_2, window_bounds = array<i64: 8, 128>}]} {
    %c0 = arith.constant 0 : index
    %0 = memref.load %arg1[%c0] : memref<9xf32, #tpu.memory_space<smem>>
    %c1 = arith.constant 1 : index
    %1 = memref.load %arg1[%c1] : memref<9xf32, #tpu.memory_space<smem>>
    %c2 = arith.constant 2 : index
    %2 = memref.load %arg1[%c2] : memref<9xf32, #tpu.memory_space<smem>>
    %c3 = arith.constant 3 : index
    %3 = memref.load %arg1[%c3] : memref<9xf32, #tpu.memory_space<smem>>
    %c4 = arith.constant 4 : index
    %4 = memref.load %arg1[%c4] : memref<9xf32, #tpu.memory_space<smem>>
    %c5 = arith.constant 5 : index
    %5 = memref.load %arg1[%c5] : memref<9xf32, #tpu.memory_space<smem>>
    %c6 = arith.constant 6 : index
    %6 = memref.load %arg1[%c6] : memref<9xf32, #tpu.memory_space<smem>>
    %c7 = arith.constant 7 : index
    %7 = memref.load %arg1[%c7] : memref<9xf32, #tpu.memory_space<smem>>
    %c8 = arith.constant 8 : index
    %8 = memref.load %arg1[%c8] : memref<9xf32, #tpu.memory_space<smem>>
    %c0_0 = arith.constant 0 : index
    %c0_1 = arith.constant 0 : index
    %c0_2 = arith.constant 0 : index
    %9 = vector.load %arg2[%c0_0, %c0_1, %c0_2] : memref<2x8x128xf32, #tpu.memory_space<vmem>>, vector<1x8x128xf32>
    %10 = vector.shape_cast %9 : vector<1x8x128xf32> to vector<8x128xf32>
    %c1_3 = arith.constant 1 : index
    %c0_4 = arith.constant 0 : index
    %c0_5 = arith.constant 0 : index
    %11 = vector.load %arg2[%c1_3, %c0_4, %c0_5] : memref<2x8x128xf32, #tpu.memory_space<vmem>>, vector<1x8x128xf32>
    %12 = vector.shape_cast %11 : vector<1x8x128xf32> to vector<8x128xf32>
    %13 = vector.broadcast %0 : f32 to vector<8x128xf32>
    %14 = arith.mulf %10, %13 : vector<8x128xf32>
    %15 = vector.broadcast %1 : f32 to vector<8x128xf32>
    %16 = arith.mulf %12, %15 : vector<8x128xf32>
    %17 = arith.addf %14, %16 : vector<8x128xf32>
    %18 = vector.broadcast %4 : f32 to vector<8x128xf32>
    %19 = arith.addf %17, %18 : vector<8x128xf32>
    %20 = vector.broadcast %2 : f32 to vector<8x128xf32>
    %21 = arith.mulf %10, %20 : vector<8x128xf32>
    %22 = vector.broadcast %3 : f32 to vector<8x128xf32>
    %23 = arith.mulf %12, %22 : vector<8x128xf32>
    %24 = arith.addf %21, %23 : vector<8x128xf32>
    %25 = vector.broadcast %5 : f32 to vector<8x128xf32>
    %26 = arith.addf %24, %25 : vector<8x128xf32>
    %27 = arith.negf %19 : vector<8x128xf32>
    %28 = math.exp %27 : vector<8x128xf32>
    %cst = arith.constant 1.000000e+00 : f32
    %29 = vector.broadcast %cst : f32 to vector<8x128xf32>
    %30 = arith.addf %29, %28 : vector<8x128xf32>
    %31 = arith.divf %29, %30 : vector<8x128xf32>
    %32 = arith.mulf %19, %31 : vector<8x128xf32>
    %33 = arith.negf %26 : vector<8x128xf32>
    %34 = math.exp %33 : vector<8x128xf32>
    %cst_6 = arith.constant 1.000000e+00 : f32
    %35 = vector.broadcast %cst_6 : f32 to vector<8x128xf32>
    %36 = arith.addf %35, %34 : vector<8x128xf32>
    %37 = arith.divf %35, %36 : vector<8x128xf32>
    %38 = arith.mulf %26, %37 : vector<8x128xf32>
    %39 = vector.broadcast %6 : f32 to vector<8x128xf32>
    %40 = arith.mulf %32, %39 : vector<8x128xf32>
    %41 = vector.broadcast %7 : f32 to vector<8x128xf32>
    %42 = arith.mulf %38, %41 : vector<8x128xf32>
    %43 = arith.addf %40, %42 : vector<8x128xf32>
    %44 = vector.broadcast %8 : f32 to vector<8x128xf32>
    %45 = arith.addf %43, %44 : vector<8x128xf32>
    %c0_7 = arith.constant 0 : index
    %c0_8 = arith.constant 0 : index
    %46 = vector.load %arg3[%c0_7, %c0_8] : memref<8x128xf32, #tpu.memory_space<vmem>>, vector<8x128xf32>
    tpu.vector_store %arg3[%c0_7, %c0_8], %45 {strides = array<i32>} : memref<8x128xf32, #tpu.memory_space<vmem>>, vector<8x128xf32>,
    return
  }
  func.func @transform_0(%arg0: i32) -> i32 {
    %c0_i32 = arith.constant 0 : i32
    %c0_i32_0 = arith.constant 0 : i32
    return %c0_i32 : i32
  }
  func.func @transform_1(%arg0: i32) -> (i32, i32, i32) {
    %c0_i32 = arith.constant 0 : i32
    %c0_i32_0 = arith.constant 0 : i32
    %c0_i32_1 = arith.constant 0 : i32
    return %c0_i32, %arg0, %c0_i32_0 : i32, i32, i32
  }
  func.func @transform_2(%arg0: i32) -> (i32, i32) {
    %c0_i32 = arith.constant 0 : i32
    %c0_i32_0 = arith.constant 0 : i32
    return %arg0, %c0_i32 : i32, i32
  }
}

</mosaic_0001>

<llo_original>
// kernel: tpu_custom_call.1
$region0: #{tpu_custom_call.1}
  #allocation0 [shape = 'u32[]', space=smem, size = 0x4, offset = 0x4, fixed_abs, tag = 'smem constant byte address 0x4 - core index']
  #allocation1 [shape = 'u32[72,128]{1,0:T(1,128)}', space=vmem, size = 0x9000, scoped, tag = 'internal scratch']
  %s0 = inlined_call_operand.hbm [shape: f32[9], index: 0, kind: input, shape index: {}]
  %s1 = inlined_call_operand.hbm [shape: f32[2,8,128], index: 1, kind: input, shape index: {}]
  %s2 = inlined_call_operand.hbm [shape: f32[8,128], index: 2, kind: output, shape index: {}]
  %s3 = sld [smem:[#allocation0]]
  $region26: #{tpu_custom_call.1} parent=0
    _
  %s5 = ssub.s32 1, %s3
  %s6 = scalar_select 0, %s5, %s3
  $region1: #{tpu_custom_call.1} parent=0
    #allocation2 [shape = 'u8[512]{0}', space=smem, size = 0x200, scoped, tag = 'input window, operand 0, single buffered']
    #allocation3 [shape = 's32[1]{0}', space=sflag, size = 0x4, scoped, tag = 'scoped memory for tpu_custom_call.1']
    #allocation4 [shape = 's32[1]{0}', space=sflag, size = 0x4, scoped, tag = 'scoped memory for tpu_custom_call.1']
    #allocation5 [shape = 's32[1]{0}', space=sflag, size = 0x4, scoped, tag = 'scoped memory for tpu_custom_call.1']
    #allocation6 [shape = 'u8[8192]{0}', space=vmem, size = 0x2000, scoped, tag = 'input window, operand 1, single buffered']
    #allocation7 [shape = 'u8[4096]{0}', space=vmem, size = 0x1000, scoped, tag = 'output window, operand 0, single buffered']
    %7 = vsyncpa [#allocation5], 0
    %8 = vsyncpa [#allocation3], 0
    %9 = vsyncpa [#allocation4], 0
    // Predicated region
    $region2: #{tpu_custom_call.1} parent=1 // pred_check
      _
    $region3: #{tpu_custom_call.1} parent=1 // pred_check_branch
      %11 = sbr.rel (0) target = $region5
    $region4: #{tpu_custom_call.1} parent=1 // pred_region
      %13 = vsyncadd [#allocation5], 0
      %s15 = sshll.u32 %s0, 4
      %s16 = int_to_ptr.hbm [resolvable:$true] %s15
      %18 = dma.hbm_to_smem %s16, 16, [#allocation2], [#allocation5]
    $region5: #{tpu_custom_call.1} parent=1 // pred_fallthru
      _
    // Predicated region
    $region6: #{tpu_custom_call.1} parent=1 // pred_check
      _
    $region7: #{tpu_custom_call.1} parent=1 // pred_check_branch
      %20 = sbr.rel (0) target = $region9
    $region8: #{tpu_custom_call.1} parent=1 // pred_region
      %22 = vsyncadd [#allocation3], 0
      %s23 = sshll.u32 %s1, 4
      %s24 = int_to_ptr.hbm [resolvable:$true] %s23
      %s25 = sshll.u32 [#allocation6], 4
      %s26 = int_to_ptr.vmem [resolvable:$true] %s25
      %31 = dma.hbm_to_vmem [thread:$0]  %s24, 256, %s26, [#allocation3], 128, 128, 8
    $region9: #{tpu_custom_call.1} parent=1 // pred_fallthru
      _
    // Predicated region
    $region10: #{tpu_custom_call.1} parent=1 // pred_check
      _
    $region11: #{tpu_custom_call.1} parent=1 // pred_check_branch
      %33 = sbr.rel (0) target = $region13
    $region12: #{tpu_custom_call.1} parent=1 // pred_region
      %35 = dma.done [#allocation5], 16
    $region13: #{tpu_custom_call.1} parent=1 // pred_fallthru
      _
    // Predicated region
    $region14: #{tpu_custom_call.1} parent=1 // pred_check
      _
    $region15: #{tpu_custom_call.1} parent=1 // pred_check_branch
      %37 = sbr.rel (0) target = $region17
    $region16: #{tpu_custom_call.1} parent=1 // pred_region
      %39 = dma.done [#allocation3], 256
    $region17: #{tpu_custom_call.1} parent=1 // pred_fallthru
      _
    %40 = sfence
    %s41 = sld [smem:[#allocation2]]
    %s42 = sld [smem:[#allocation2 + $0x1]]
    %s43 = sld [smem:[#allocation2 + $0x2]]
    %s44 = sld [smem:[#allocation2 + $0x3]]
    %s45 = sld [smem:[#allocation2 + $0x4]]
    %s46 = sld [smem:[#allocation2 + $0x5]]
    %s47 = sld [smem:[#allocation2 + $0x6]]
    %s48 = sld [smem:[#allocation2 + $0x7]]
    %s49 = sld [smem:[#allocation2 + $0x8]]
    %v50 = vld [vmem:[#allocation6] sm:$0xff]
    %s51 = scalar_lea.vmem [#allocation6], 8
    %v52 = vld [vmem:[%s51] sm:$0xff]
    %v53 = vstv %s41
    %v54 = vmul.f32 %v50, %v53
    %v55 = vstv %s42
    %v56 = vmul.f32 %v52, %v55
    %v57 = vadd.f32 %v54, %v56
    %v58 = vstv %s45
    %v59 = vadd.f32 %v57, %v58
    %v60 = vstv %s43
    %v61 = vmul.f32 %v50, %v60
    %v62 = vstv %s44
    %v63 = vmul.f32 %v52, %v62
    %v64 = vadd.f32 %v61, %v63
    %v65 = vstv %s46
    %v66 = vadd.f32 %v64, %v65
    %v67 = vxor.u32 %v59, 2147483648
    %v68 = vmul.f32 %v67, 1.442695
    %v69 = vpow.pop %v68
    %v70 = vadd.f32 %v69, 1.0
    %v71 = vrcp.pop %v70
    %v72 = vmul.f32 %v70, %v71
    %v73 = vsub.f32 1.0, %v72
    %v74 = vmul.f32 %v71, %v73
    %v75 = vadd.f32 %v71, %v74
    %vm76 = vweird.f32 %v70
    %vm77 = vweird.f32 %v71
    %vm78 = vmor %vm76, %vm77
    %v79 = vsel %vm78, %v71, %v75
    %v80 = vand.u32 2147483647, %v70
    %vm81 = vcmp.eq.f32.partialorder %v80, 8.507059e+37
    %v82 = vand.u32 %v70, 2147483648
    %v83 = vor.u32 1.1754944e-38, %v82
    %v84 = vsel %vm81, %v83, %v79
    %v85 = vmul.f32 1.0, %v84
    %v86 = vmul.f32 %v59, %v85
    %v87 = vxor.u32 %v66, 2147483648
    %v88 = vmul.f32 %v87, 1.442695
    %v89 = vpow.pop %v88
    %v90 = vadd.f32 %v89, 1.0
    %v91 = vrcp.pop %v90
    %v92 = vmul.f32 %v90, %v91
    %v93 = vsub.f32 1.0, %v92
    %v94 = vmul.f32 %v91, %v93
    %v95 = vadd.f32 %v91, %v94
    %vm96 = vweird.f32 %v90
    %vm97 = vweird.f32 %v91
    %vm98 = vmor %vm96, %vm97
    %v99 = vsel %vm98, %v91, %v95
    %v100 = vand.u32 2147483647, %v90
    %vm101 = vcmp.eq.f32.partialorder %v100, 8.507059e+37
    %v102 = vand.u32 %v90, 2147483648
    %v103 = vor.u32 1.1754944e-38, %v102
    %v104 = vsel %vm101, %v103, %v99
    %v105 = vmul.f32 1.0, %v104
    %v106 = vmul.f32 %v66, %v105
    %v107 = vstv %s47
    %v108 = vmul.f32 %v86, %v107
    %v109 = vstv %s48
    %v110 = vmul.f32 %v106, %v109
    %v111 = vadd.f32 %v108, %v110
    %v112 = vstv %s49
    %v113 = vadd.f32 %v111, %v112
    %114 = vst [vmem:[#allocation7] sm:$0xff] %v113
    // Predicated region
    $region18: #{tpu_custom_call.1} parent=1 // pred_check
      _
    $region19: #{tpu_custom_call.1} parent=1 // pred_check_branch
      %116 = sbr.rel (0) target = $region21
    $region20: #{tpu_custom_call.1} parent=1 // pred_region
      %118 = vsyncadd [#allocation4], 0
      %s120 = sshll.u32 [#allocation7], 4
      %s121 = int_to_ptr.vmem [resolvable:$true] %s120
      %s122 = sshll.u32 %s2, 4
      %s123 = int_to_ptr.hbm [resolvable:$true] %s122
      %125 = dma.vmem_to_hbm [thread:$0]  %s121, 128, %s123, [#allocation4]
    $region21: #{tpu_custom_call.1} parent=1 // pred_fallthru
      _
    // Predicated region
    $region22: #{tpu_custom_call.1} parent=1 // pred_check
      _
    $region23: #{tpu_custom_call.1} parent=1 // pred_check_branch
      %127 = sbr.rel (0) target = $region25
    $region24: #{tpu_custom_call.1} parent=1 // pred_region
      %129 = dma.done [#allocation4], 128
    $region25: #{tpu_custom_call.1} parent=1 // pred_fallthru
      _
    %130 = vsyncpa [#allocation3], 1
    %131 = vsyncpa [#allocation4], 1
    %132 = vsyncpa [#allocation5], 1

</llo_original>
